<compile_context>
chip_gen: v7x
topology: tpu7x:2x2x1
jax: 0.10.0
libtpu: 0.0.40
codegen_flags: <defaults>
</compile_context>

<pallas_src>
import jax
import jax.numpy as jnp
from jax.experimental import pallas as pl
from jax.experimental.pallas import tpu as pltpu

# Static sizes implied by Linear(68, 3):  L_IN - 2 (conv) - 2 (pool) = 68 -> L_IN = 72
B = 2
C_IN = 4
C_OUT = 8
L_IN = 72
L_CONV = L_IN - 2     # 70
L_POOL = L_CONV - 2   # 68
FC_OUT = 3

LANES = 128                  # lane-dense padded length
R_X = B * C_IN               # 8   rows of the lane-dense input
R_Y = B * C_OUT              # 16  rows of the lane-dense conv output
K_CONV = 3 * B * C_IN        # 24  contraction dim of the fused conv matmul
N_OUT = 8                    # FC output lanes (3 real + 5 zero pad)
PACK_ROWS = 32               # parameter-pack rows

# Parameter-pack layout (single (32, 128) f32 VMEM input):
#   rows 0:16 , cols 0:24  -> W_big: fused conv weight, block-diagonal over batch
#   rows 0:16 , col  24    -> conv bias per output row (b*C_OUT + co)
#   rows 16:24, cols 0:68  -> wfc (rows 16..18 real, 19..23 zero)
#   row  24   , cols 0:8   -> bfc (cols 0..2 real, 3..7 zero)
ROW_WFC = R_Y                # 16
ROW_BFC = ROW_WFC + N_OUT    # 24
COL_BCONV = K_CONV           # 24


def _shift_left(v, k):
    """v[:, t] -> v[:, t + k] along the lane axis; tail columns zero-filled.

    Pure lane-axis data movement (XLU-side relayout); avoids the non-8-aligned
    sublane-offset slices of the channel-last version.
    """
    if k == 0:
        return v
    pad = jnp.zeros((v.shape[0], k), v.dtype)
    return jnp.concatenate([v[:, k:], pad], axis=1)


def net2_kernel(x_ref, p_ref, out_ref):
    # x_ref:   (8, 128)  f32, row = b*C_IN + ci, cols 0:72 = data, rest zero
    # p_ref:   (32, 128) f32 parameter pack (layout above)
    # out_ref: (16, 8)   f32, row = b*C_OUT + co, cols 0:3 = fc output, 3:8 = 0
    x = x_ref[...]                                       # (8, 128) = 1 vreg
    params = p_ref[...]                                  # (32, 128) = 4 vregs

    # ---- Conv1d(k=3) as ONE MXU matmul --------------------------------------
    # im2col along sublanes: stack the k = 0, 1, 2 lane-shifted copies of x.
    xs = jnp.concatenate(
        [x, _shift_left(x, 1), _shift_left(x, 2)], axis=0)           # (24, 128)
    w_conv = params[0:R_Y, 0:K_CONV]                                 # (16, 24)
    y = jax.lax.dot_general(w_conv, xs, (((1,), (0,)), ((), ())),
                            preferred_element_type=jnp.float32)      # (16, 128)
    y = y + params[0:R_Y, COL_BCONV:COL_BCONV + 1]                   # + conv bias

    # ---- ReLU + MaxPool1d(k=3, s=1): lane-dense VPU ops ----------------------
    y = jnp.maximum(y, 0.0)
    p = jnp.maximum(jnp.maximum(y, _shift_left(y, 1)),
                    _shift_left(y, 2))                               # (16, 128)
    # cols >= 68 of p are finite garbage; they are multiplied by zero FC weights.

    # ---- Linear(68, 3) as ONE MXU matmul (contraction over lanes) ------------
    w_fc = params[ROW_WFC:ROW_WFC + N_OUT, :]                        # (8, 128)
    fc = jax.lax.dot_general(p, w_fc, (((1,), (1,)), ((), ())),
                             preferred_element_type=jnp.float32)     # (16, 8)
    out_ref[...] = fc + params[ROW_BFC:ROW_BFC + 1, 0:N_OUT]         # + fc bias


def _pack_params(wconv, bconv, wfc, bfc):
    """Pack all parameters into one (32, 128) f32 block (a single DMA)."""
    pack = jnp.zeros((PACK_ROWS, LANES), jnp.float32)
    # W_big[b*C_OUT + co, k*(B*C_IN) + b'*C_IN + ci] = wconv[co, ci, k] * [b == b']
    w_kc = jnp.transpose(wconv, (0, 2, 1))                           # (C_OUT, 3, C_IN)
    w_big = jnp.einsum('bd,okc->bokdc', jnp.eye(B, dtype=jnp.float32), w_kc)
    w_big = w_big.reshape(B * C_OUT, K_CONV)                         # (16, 24)
    pack = pack.at[0:R_Y, 0:K_CONV].set(w_big)
    pack = pack.at[0:R_Y, COL_BCONV].set(jnp.tile(bconv, (B,)))      # bias per row
    pack = pack.at[ROW_WFC:ROW_WFC + FC_OUT, 0:L_POOL].set(wfc)      # (3, 68)
    pack = pack.at[ROW_BFC, 0:FC_OUT].set(bfc)                       # (3,)
    return pack


def net2_forward(x, wconv, bconv, wfc, bfc):
    """x: (B, L_IN, C_IN) f32 -> (B, C_OUT * FC_OUT) f32 (matches Net2.forward)."""
    # Wrapper-side layout plumbing: channel-last -> lane-dense (length on lanes).
    x_lane = jnp.transpose(x, (0, 2, 1)).reshape(R_X, L_IN)
    x_lane = jnp.pad(x_lane, ((0, 0), (0, LANES - L_IN)))            # (8, 128)
    params = _pack_params(wconv, bconv, wfc, bfc)                    # (32, 128)

    vmem = pl.BlockSpec(memory_space=pltpu.MemorySpace.VMEM)
    raw = pl.pallas_call(
        net2_kernel,
        out_shape=jax.ShapeDtypeStruct((R_Y, N_OUT), jnp.float32),
        in_specs=[vmem, vmem],
        out_specs=vmem,
    )(x_lane, params)
    # rows are (b, co); cols 0:3 hold the fc outputs -> flatten(start_dim=1).
    return raw[:, :FC_OUT].reshape(B, C_OUT * FC_OUT)


def reference_forward(x, wconv, bconv, wfc, bfc):
    """Pure-JAX reference matching the PyTorch module semantics."""
    xp = jnp.transpose(x, (0, 2, 1))                                 # (B, C_IN, L)
    y = jnp.zeros((B, C_OUT, L_CONV), jnp.float32)
    for k in range(3):
        y = y + jnp.einsum('bcl,oc->bol', xp[:, :, k:k + L_CONV], wconv[:, :, k])
    y = y + bconv[None, :, None]
    y = jnp.maximum(y, 0.0)
    p = jnp.maximum(jnp.maximum(y[:, :, 0:L_POOL], y[:, :, 1:L_POOL + 1]),
                    y[:, :, 2:L_POOL + 2])                           # (B, C_OUT, 68)
    o = jnp.einsum('bol,jl->boj', p, wfc) + bfc[None, None, :]
    return o.reshape(B, C_OUT * FC_OUT)


if __name__ == "__main__":
    key = jax.random.PRNGKey(0)
    kx, kw1, kb1, kw2, kb2 = jax.random.split(key, 5)

    x = jax.random.normal(kx, (B, L_IN, C_IN), dtype=jnp.float32)

    bound_conv = 1.0 / (C_IN * 3) ** 0.5
    wconv = jax.random.uniform(kw1, (C_OUT, C_IN, 3), jnp.float32,
                               -bound_conv, bound_conv)
    bconv = jax.random.uniform(kb1, (C_OUT,), jnp.float32,
                               -bound_conv, bound_conv)

    bound_fc = 1.0 / L_POOL ** 0.5
    wfc = jax.random.uniform(kw2, (FC_OUT, L_POOL), jnp.float32,
                             -bound_fc, bound_fc)
    bfc = jax.random.uniform(kb2, (FC_OUT,), jnp.float32,
                             -bound_fc, bound_fc)

    out = jax.block_until_ready(net2_forward(x, wconv, bconv, wfc, bfc))
    ref = reference_forward(x, wconv, bconv, wfc, bfc)

    assert out.shape == (B, C_OUT * FC_OUT)
    assert jnp.allclose(out, ref, atol=1e-4, rtol=1e-4), (
        f"max abs diff = {jnp.max(jnp.abs(out - ref))}")

    print("KERNEL_OK")
</pallas_src>

<mosaic_0001>
module attributes {stable_mosaic.version = 11 : i64} {
  func.func @net2_kernel(%arg0: memref<8x128xf32, #tpu.memory_space<vmem>>, %arg1: memref<32x128xf32, #tpu.memory_space<vmem>>, %arg2: memref<16x8xf32, #tpu.memory_space<vmem>>) attributes {dimension_semantics = [], scalar_prefetch = 0 : i64, scratch_operands = 0 : i64, tpu.core_type = #tpu.core_type<tc>} {
    %c0 = arith.constant 0 : index
    %c0_0 = arith.constant 0 : index
    %0 = vector.load %arg0[%c0, %c0_0] : memref<8x128xf32, #tpu.memory_space<vmem>>, vector<8x128xf32>
    %c0_1 = arith.constant 0 : index
    %c0_2 = arith.constant 0 : index
    %1 = vector.load %arg1[%c0_1, %c0_2] : memref<32x128xf32, #tpu.memory_space<vmem>>, vector<32x128xf32>
    %cst = arith.constant 0.000000e+00 : f32
    %2 = vector.broadcast %cst : f32 to vector<8x1xf32>
    %3 = vector.extract_strided_slice %0 {offsets = [0, 1], sizes = [8, 127], strides = [1, 1]} : vector<8x128xf32> to vector<8x127xf32>
    %4 = tpu.concatenate %3, %2 in 1 : vector<8x127xf32>, vector<8x1xf32> -> vector<8x128xf32>
    %cst_3 = arith.constant 0.000000e+00 : f32
    %5 = vector.broadcast %cst_3 : f32 to vector<8x2xf32>
    %6 = vector.extract_strided_slice %0 {offsets = [0, 2], sizes = [8, 126], strides = [1, 1]} : vector<8x128xf32> to vector<8x126xf32>
    %7 = tpu.concatenate %6, %5 in 1 : vector<8x126xf32>, vector<8x2xf32> -> vector<8x128xf32>
    %8 = tpu.concatenate %0, %4, %7 in 0 : vector<8x128xf32>, vector<8x128xf32>, vector<8x128xf32> -> vector<24x128xf32>
    %9 = vector.extract_strided_slice %1 {offsets = [0, 0], sizes = [16, 24], strides = [1, 1]} : vector<32x128xf32> to vector<16x24xf32>
    %cst_4 = arith.constant dense<0.000000e+00> : vector<16x128xf32>
    %10 = tpu.matmul %9, %8, %cst_4 {dimension_numbers = #tpu.dot_dimension_numbers<[1], [0], [0], [1], [0, 0, 1, 1], [], []>} : vector<16x24xf32>, vector<24x128xf32>, vector<16x128xf32> -> vector<16x128xf32>
    %11 = vector.extract_strided_slice %1 {offsets = [0, 24], sizes = [16, 1], strides = [1, 1]} : vector<32x128xf32> to vector<16x1xf32>
    %12 = vector.broadcast %11 : vector<16x1xf32> to vector<16x128xf32>
    %13 = arith.addf %10, %12 : vector<16x128xf32>
    %cst_5 = arith.constant 0.000000e+00 : f32
    %14 = vector.broadcast %cst_5 : f32 to vector<16x128xf32>
    %15 = arith.maximumf %13, %14 : vector<16x128xf32>
    %cst_6 = arith.constant 0.000000e+00 : f32
    %16 = vector.broadcast %cst_6 : f32 to vector<16x1xf32>
    %17 = vector.extract_strided_slice %15 {offsets = [0, 1], sizes = [16, 127], strides = [1, 1]} : vector<16x128xf32> to vector<16x127xf32>
    %18 = tpu.concatenate %17, %16 in 1 : vector<16x127xf32>, vector<16x1xf32> -> vector<16x128xf32>
    %19 = arith.maximumf %15, %18 : vector<16x128xf32>
    %cst_7 = arith.constant 0.000000e+00 : f32
    %20 = vector.broadcast %cst_7 : f32 to vector<16x2xf32>
    %21 = vector.extract_strided_slice %15 {offsets = [0, 2], sizes = [16, 126], strides = [1, 1]} : vector<16x128xf32> to vector<16x126xf32>
    %22 = tpu.concatenate %21, %20 in 1 : vector<16x126xf32>, vector<16x2xf32> -> vector<16x128xf32>
    %23 = arith.maximumf %19, %22 : vector<16x128xf32>
    %24 = vector.extract_strided_slice %1 {offsets = [16, 0], sizes = [8, 128], strides = [1, 1]} : vector<32x128xf32> to vector<8x128xf32>
    %cst_8 = arith.constant dense<0.000000e+00> : vector<16x8xf32>
    %25 = tpu.matmul %23, %24, %cst_8 {dimension_numbers = #tpu.dot_dimension_numbers<[1], [1], [0], [0], [0, 0, 1, 0], [], []>} : vector<16x128xf32>, vector<8x128xf32>, vector<16x8xf32> -> vector<16x8xf32>
    %26 = vector.extract_strided_slice %1 {offsets = [24, 0], sizes = [1, 8], strides = [1, 1]} : vector<32x128xf32> to vector<1x8xf32>
    %27 = vector.broadcast %26 : vector<1x8xf32> to vector<16x8xf32>
    %28 = arith.addf %25, %27 : vector<16x8xf32>
    %c0_9 = arith.constant 0 : index
    %c0_10 = arith.constant 0 : index
    %29 = vector.load %arg2[%c0_9, %c0_10] : memref<16x8xf32, #tpu.memory_space<vmem>>, vector<16x8xf32>
    tpu.vector_store %arg2[%c0_9, %c0_10], %28 {strides = array<i32>} : memref<16x8xf32, #tpu.memory_space<vmem>>, vector<16x8xf32>,
    return
  }
}

</mosaic_0001>

<llo_original>
// kernel: tpu_custom_call.1
$region0: #{tpu_custom_call.1}
  #allocation0 [shape = 'u32[]', space=smem, size = 0x4, offset = 0x4, fixed_abs, tag = 'smem constant byte address 0x4 - core index']
  #allocation1 [shape = 'u32[144,128]{1,0:T(1,128)}', space=vmem, size = 0x12000, scoped, tag = 'internal scratch']
  %s0 = inlined_call_operand.hbm [shape: f32[8,128], index: 0, kind: input, shape index: {}]
  %s1 = inlined_call_operand.hbm [shape: f32[32,128], index: 1, kind: input, shape index: {}]
  %s2 = inlined_call_operand.vmem [shape: f32[16,8], index: 2, kind: output, shape index: {}]
  %s3 = sld [smem:[#allocation0]]
  $region26: #{tpu_custom_call.1} parent=0
    _
  %s5 = ssub.s32 1, %s3
  %s6 = scalar_select 0, %s5, %s3
  $region1: #{tpu_custom_call.1} parent=0
    #allocation2 [shape = 'u8[4096]{0}', space=vmem, size = 0x1000, scoped, tag = 'input window, operand 0, single buffered']
    #allocation3 [shape = 's32[1]{0}', space=sflag, size = 0x4, scoped, tag = 'scoped memory for tpu_custom_call.1']
    #allocation4 [shape = 'u8[16384]{0}', space=vmem, size = 0x4000, scoped, tag = 'input window, operand 1, single buffered']
    #allocation5 [shape = 's32[1]{0}', space=sflag, size = 0x4, scoped, tag = 'scoped memory for tpu_custom_call.1']
    %7 = vsyncpa [#allocation3], 0
    %8 = vsyncpa [#allocation5], 0
    // Predicated region
    $region2: #{tpu_custom_call.1} parent=1 // pred_check
      _
    $region3: #{tpu_custom_call.1} parent=1 // pred_check_branch
      %10 = sbr.rel (0) target = $region5
    $region4: #{tpu_custom_call.1} parent=1 // pred_region
      %s12 = ssub.s32 128, 128
      %13 = vsyncadd [#allocation3], %s12
      %s15 = sshll.u32 [#allocation2], 4
      %s16 = int_to_ptr.vmem [resolvable:$true] %s15
      %18 = dma.hbm_to_vmem [thread:$0]  %s0, 128, %s16, [#allocation3]
    $region5: #{tpu_custom_call.1} parent=1 // pred_fallthru
      _
    // Predicated region
    $region6: #{tpu_custom_call.1} parent=1 // pred_check
      _
    $region7: #{tpu_custom_call.1} parent=1 // pred_check_branch
      %20 = sbr.rel (0) target = $region9
    $region8: #{tpu_custom_call.1} parent=1 // pred_region
      %s22 = ssub.s32 512, 512
      %23 = vsyncadd [#allocation5], %s22
      %s24 = sshll.u32 [#allocation4], 4
      %s25 = int_to_ptr.vmem [resolvable:$true] %s24
      %30 = dma.hbm_to_vmem [thread:$0]  %s1, 512, %s25, [#allocation5], 128, 128, 8
    $region9: #{tpu_custom_call.1} parent=1 // pred_fallthru
      _
    // Predicated region
    $region10: #{tpu_custom_call.1} parent=1 // pred_check
      _
    $region11: #{tpu_custom_call.1} parent=1 // pred_check_branch
      %32 = sbr.rel (0) target = $region13
    $region12: #{tpu_custom_call.1} parent=1 // pred_region
      %33 = dma.done [#allocation3], 128
    $region13: #{tpu_custom_call.1} parent=1 // pred_fallthru
      _
    // Predicated region
    $region14: #{tpu_custom_call.1} parent=1 // pred_check
      _
    $region15: #{tpu_custom_call.1} parent=1 // pred_check_branch
      %35 = sbr.rel (0) target = $region17
    $region16: #{tpu_custom_call.1} parent=1 // pred_region
      %36 = dma.done [#allocation5], 512
    $region17: #{tpu_custom_call.1} parent=1 // pred_fallthru
      _
    %v37 = vld [vmem:[#allocation2] sm:$0xff]
    %v38 = vld [vmem:[#allocation4] sm:$0xff]
    %v39 = vld [vmem:[#allocation4 + $0x8] sm:$0xff]
    %v40 = vld [vmem:[#allocation4 + $0x10] sm:$0xff]
    %v41 = vld [vmem:[#allocation4 + $0x18] sm:$0xff]
    %43 = vrot.lane.b32.xlu0 %v37, 127
    %v44 = vpop.permute.xlu0 %43
    %vm46 = vcmask 1039360
    %v47 = vsel %vm46, %v44, 0.0
    %48 = vrot.lane.b32.xlu0 %v37, 126
    %v49 = vpop.permute.xlu0 %48
    %vm51 = vcmask 1031168
    %v52 = vsel %vm51, %v49, 0.0
    %54 = vset.pattern.permute.xlu0 24
    %55 = vperm.xlu0 %54, %v38
    %v56 = vpop.permute.xlu0 %55
    %59 = vset.pattern.permute.xlu0 24
    %60 = vperm.xlu0 %59, %v39
    %v61 = vpop.permute.xlu0 %60
    %vm63 = vcmask 195584
    %v64 = vsel %vm63, %v38, 0
    %v66 = vsel %vm63, %v39, 0
    %68 = vmatprep.subr.mxu0 0.0
    %69 = vmatpush1.msra.mxu0 %v37
    %70 = vmatprep.subr.mxu0 0.0
    %71 = vmatpush1.msra.mxu0 %v47
    %72 = vmatprep.subr.mxu0 0.0
    %73 = vmatpush1.msra.mxu0 %v52
    %74 = vmatprep.subr.mxu0 0.0
    %75 = vmatpush1.msra.mxu0 0.0
    %76 = vmatprep.subr.mxu0 0.0
    %77 = vmatpush1.msra.mxu0 0.0
    %78 = vmatprep.subr.mxu0 0.0
    %79 = vmatpush1.msra.mxu0 0.0
    %80 = vmatprep.subr.mxu0 0.0
    %81 = vmatpush1.msra.mxu0 0.0
    %82 = vmatprep.subr.mxu0 0.0
    %83 = vmatpush1.msra.mxu0 0.0
    %84 = vmatprep.subr.mxu0 0.0
    %85 = vmatpush1.msra.mxu0 0.0
    %86 = vmatprep.subr.mxu0 0.0
    %87 = vmatpush1.msra.mxu0 0.0
    %88 = vmatprep.subr.mxu0 0.0
    %89 = vmatpush1.msra.mxu0 0.0
    %90 = vmatprep.subr.mxu0 0.0
    %91 = vmatpush1.msra.mxu0 0.0
    %92 = vmatprep.subr.mxu0 0.0
    %93 = vmatpush1.msra.mxu0 0.0
    %94 = vmatprep.subr.mxu0 0.0
    %95 = vmatpush1.msra.mxu0 0.0
    %96 = vmatprep.subr.mxu0 0.0
    %97 = vmatpush1.msra.mxu0 0.0
    %98 = vmatprep.subr.mxu0 0.0
    %99 = vmatpush1.msra.mxu0 0.0
    %100 = vmatprep.subr.mxu0 0.0
    %101 = vmatpush1.msra.mxu0 0.0
    %102 = vmatprep.subr.mxu0 0.0
    %103 = vmatpush1.msra.mxu0 0.0
    %104 = vmatprep.subr.mxu0 0.0
    %105 = vmatpush1.msra.mxu0 0.0
    %106 = vmatprep.subr.mxu0 0.0
    %107 = vmatpush1.msra.mxu0 0.0
    %108 = vmatprep.subr.mxu0 0.0
    %109 = vmatpush1.msra.mxu0 0.0
    %110 = vmatprep.subr.mxu0 0.0
    %111 = vmatpush1.msra.mxu0 0.0
    %112 = vmatprep.subr.mxu0 0.0
    %113 = vmatpush1.msra.mxu0 0.0
    %114 = vmatprep.subr.mxu0 0.0
    %115 = vmatpush1.msra.mxu0 0.0
    %116 = vmatprep.subr.mxu0 0.0
    %117 = vmatpush1.msra.mxu0 0.0
    %118 = vmatprep.subr.mxu0 0.0
    %119 = vmatpush1.msra.mxu0 0.0
    %120 = vmatprep.subr.mxu0 0.0
    %121 = vmatpush1.msra.mxu0 0.0
    %122 = vmatprep.subr.mxu0 0.0
    %123 = vmatpush1.msra.mxu0 0.0
    %124 = vmatprep.subr.mxu0 0.0
    %125 = vmatpush1.msra.mxu0 0.0
    %126 = vmatprep.subr.mxu0 0.0
    %127 = vmatpush1.msra.mxu0 0.0
    %128 = vmatprep.subr.mxu0 0.0
    %129 = vmatpush1.msra.mxu0 0.0
    %130 = vmatprep.subr.mxu0 0.0
    %131 = vmatpush1.msra.mxu0 0.0
    %132 = vmatprep.mubr.f32.mxu0 0.0
    %133 = vmatmul.mubr.f32.gmra.mrb[0].mxu0 %v64
    %v134 = vpop.f32.mrb[0].mxu0
    %v135 = vadd.f32 %v56, %v134
    %v136 = vpop.f32.mrb[0].mxu0
    %137 = vmatprep.mubr.f32.mxu0 0.0
    %138 = vmatmul.mubr.f32.gmra.mrb[0].mxu0 %v66
    %v139 = vpop.f32.mrb[0].mxu0
    %v140 = vadd.f32 %v61, %v139
    %v141 = vpop.f32.mrb[0].mxu0
    %142 = vdwg.mxu0
    %v143 = vmax.f32 %v135, 0.0
    %v144 = vmax.f32 %v140, 0.0
    %147 = vrot.lane.b32.xlu0 %v143, 127
    %v148 = vpop.permute.xlu0 %147
    %149 = vrot.lane.b32.xlu0 %v144, 127
    %v150 = vpop.permute.xlu0 %149
    %v153 = vsel %vm46, %v148, 0.0
    %v154 = vsel %vm46, %v150, 0.0
    %v155 = vmax.f32 %v143, %v153
    %v156 = vmax.f32 %v144, %v154
    %157 = vrot.lane.b32.xlu0 %v143, 126
    %v158 = vpop.permute.xlu0 %157
    %159 = vrot.lane.b32.xlu0 %v144, 126
    %v160 = vpop.permute.xlu0 %159
    %v163 = vsel %vm51, %v158, 0.0
    %v164 = vsel %vm51, %v160, 0.0
    %v165 = vmax.f32 %v155, %v163
    %v166 = vmax.f32 %v156, %v164
    %v167 = vlaneseq
    %v168 = vshrl.u32 %v167, 7
    %v169 = vsub.s32 0, %v168
    %v170 = vrot.slane %v41, %v169
    %171 = vmatprep.subr.mxu0 0.0
    %172 = vmatpush1.xpose.msra.mxu0 %v40
    %173 = vmatprep.subr.mxu0 0.0
    %174 = vmatpush1.xpose.msra.mxu0 0.0
    %175 = vmatprep.subr.mxu0 0.0
    %176 = vmatpush1.xpose.msra.mxu0 0.0
    %177 = vmatprep.subr.mxu0 0.0
    %178 = vmatpush1.xpose.msra.mxu0 0.0
    %179 = vmatprep.subr.mxu0 0.0
    %180 = vmatpush1.xpose.msra.mxu0 0.0
    %181 = vmatprep.subr.mxu0 0.0
    %182 = vmatpush1.xpose.msra.mxu0 0.0
    %183 = vmatprep.subr.mxu0 0.0
    %184 = vmatpush1.xpose.msra.mxu0 0.0
    %185 = vmatprep.subr.mxu0 0.0
    %186 = vmatpush1.xpose.msra.mxu0 0.0
    %187 = vmatprep.subr.mxu0 0.0
    %188 = vmatpush1.xpose.msra.mxu0 0.0
    %189 = vmatprep.subr.mxu0 0.0
    %190 = vmatpush1.xpose.msra.mxu0 0.0
    %191 = vmatprep.subr.mxu0 0.0
    %192 = vmatpush1.xpose.msra.mxu0 0.0
    %193 = vmatprep.subr.mxu0 0.0
    %194 = vmatpush1.xpose.msra.mxu0 0.0
    %195 = vmatprep.subr.mxu0 0.0
    %196 = vmatpush1.xpose.msra.mxu0 0.0
    %197 = vmatprep.subr.mxu0 0.0
    %198 = vmatpush1.xpose.msra.mxu0 0.0
    %199 = vmatprep.subr.mxu0 0.0
    %200 = vmatpush1.xpose.msra.mxu0 0.0
    %201 = vmatprep.subr.mxu0 0.0
    %202 = vmatpush1.xpose.msra.mxu0 0.0
    %203 = vmatprep.subr.mxu0 0.0
    %204 = vmatpush1.xpose.msra.mxu0 0.0
    %205 = vmatprep.subr.mxu0 0.0
    %206 = vmatpush1.xpose.msra.mxu0 0.0
    %207 = vmatprep.subr.mxu0 0.0
    %208 = vmatpush1.xpose.msra.mxu0 0.0
    %209 = vmatprep.subr.mxu0 0.0
    %210 = vmatpush1.xpose.msra.mxu0 0.0
    %211 = vmatprep.subr.mxu0 0.0
    %212 = vmatpush1.xpose.msra.mxu0 0.0
    %213 = vmatprep.subr.mxu0 0.0
    %214 = vmatpush1.xpose.msra.mxu0 0.0
    %215 = vmatprep.subr.mxu0 0.0
    %216 = vmatpush1.xpose.msra.mxu0 0.0
    %217 = vmatprep.subr.mxu0 0.0
    %218 = vmatpush1.xpose.msra.mxu0 0.0
    %219 = vmatprep.subr.mxu0 0.0
    %220 = vmatpush1.xpose.msra.mxu0 0.0
    %221 = vmatprep.subr.mxu0 0.0
    %222 = vmatpush1.xpose.msra.mxu0 0.0
    %223 = vmatprep.subr.mxu0 0.0
    %224 = vmatpush1.xpose.msra.mxu0 0.0
    %225 = vmatprep.subr.mxu0 0.0
    %226 = vmatpush1.xpose.msra.mxu0 0.0
    %227 = vmatprep.subr.mxu0 0.0
    %228 = vmatpush1.xpose.msra.mxu0 0.0
    %229 = vmatprep.subr.mxu0 0.0
    %230 = vmatpush1.xpose.msra.mxu0 0.0
    %231 = vmatprep.subr.mxu0 0.0
    %232 = vmatpush1.xpose.msra.mxu0 0.0
    %233 = vmatprep.subr.mxu0 0.0
    %234 = vmatpush1.xpose.msra.mxu0 0.0
    %235 = vmatprep.mubr.f32.mxu0 0.0
    %236 = vmatmul.mubr.f32.gmra.mrb[0].mxu0 %v165
    %v237 = vpop.f32.mrb[0].mxu0
    %v238 = vadd.f32 %v170, %v237
    %v239 = vpop.f32.mrb[0].mxu0
    %240 = vmatprep.mubr.f32.mxu0 0.0
    %241 = vmatmul.mubr.f32.gmra.mrb[0].mxu0 %v166
    %v242 = vpop.f32.mrb[0].mxu0
    %v243 = vadd.f32 %v170, %v242
    %v244 = vpop.f32.mrb[0].mxu0
    %245 = vdwg.mxu0
    %vm246 = vcmask 64512
    %247 = vst.msk [vmem:[%s2] sm:$0xff] %vm246, %v238
    %248 = vst.msk [vmem:[%s2 + $0x8] sm:$0xff] %vm246, %v243
    // Predicated region
    $region18: #{tpu_custom_call.1} parent=1 // pred_check
      _
    $region19: #{tpu_custom_call.1} parent=1 // pred_check_branch
      %250 = sbr.rel (0) target = $region21
    $region20: #{tpu_custom_call.1} parent=1 // pred_region
      _
    $region21: #{tpu_custom_call.1} parent=1 // pred_fallthru
      _
    // Predicated region
    $region22: #{tpu_custom_call.1} parent=1 // pred_check
      _
    $region23: #{tpu_custom_call.1} parent=1 // pred_check_branch
      %252 = sbr.rel (0) target = $region25
    $region24: #{tpu_custom_call.1} parent=1 // pred_region
      _
    $region25: #{tpu_custom_call.1} parent=1 // pred_fallthru
      _
    %253 = vsyncpa [#allocation3], 1
    %254 = vsyncpa [#allocation5], 1

</llo_original>
